<compile_context>
chip_gen: v6e
topology: v6e:2x2x1
jax: 0.10.0
libtpu: 0.0.40
codegen_flags: <defaults>
</compile_context>

<pallas_src>
import numpy as np
import jax
import jax.numpy as jnp
from jax.experimental import pallas as pl
from jax.experimental.pallas import tpu as pltpu


_TARGET_GRID_STEPS = 8            # >= ~4 steps per v7x TensorCore
_MIN_DMA_BYTES = 1 * 1024 * 1024  # keep per-step input DMA >= ~1 MiB
_FUSED_WEIGHT_LIMIT_BYTES = 1 * 1024 * 1024  # resident kron weight budget


# ----------------------------------------------------------------------------
# Host-side helpers
# ----------------------------------------------------------------------------
def _interp_matrix(out_size: int, in_size: int) -> np.ndarray:
    """(out_size, in_size) bilinear interpolation matrix for align_corners=True
    (matches PyTorch).  Built on host in float64 so exact-integer source
    coordinates do not suffer rounding."""
    if out_size == 1:
        src = np.zeros((1,), np.float64)
    else:
        src = np.arange(out_size, dtype=np.float64) * (
            (in_size - 1) / (out_size - 1))
    lo = np.clip(np.floor(src).astype(np.int64), 0, in_size - 1)
    hi = np.clip(lo + 1, 0, in_size - 1)
    frac = src - lo
    mat = np.zeros((out_size, in_size), np.float64)
    rows = np.arange(out_size)
    np.add.at(mat, (rows, lo), 1.0 - frac)
    np.add.at(mat, (rows, hi), frac)
    return mat


def _sublane(itemsize: int) -> int:
    return {4: 8, 2: 16, 1: 32}.get(itemsize, 8)


def _pad_up(v: int, m: int) -> int:
    return ((v + m - 1) // m) * m


def _tile_bytes(rows: int, cols: int, itemsize: int) -> int:
    """VMEM footprint of a (rows, cols) slab after (sublane, 128) padding."""
    return (_pad_up(max(rows, 1), _sublane(itemsize))
            * _pad_up(max(cols, 1), 128) * itemsize)


def _vmem_capacity_bytes() -> int:
    try:
        info = pltpu.get_tpu_info()
        cap = int(getattr(info, "vmem_capacity_bytes", 0) or 0)
        if cap > 0:
            return cap
    except Exception:
        pass
    return 64 * 1024 * 1024   # conservative: v7x per-TensorCore VMEM


def _clamp_batch(b_budget: int, nc: int, plane_in_bytes: int) -> int:
    """Clamp the plane batch: respect the VMEM budget (hard), keep the input
    DMA >= ~1 MiB (soft floor), and keep >= ~8 grid steps when possible."""
    b = int(min(b_budget, nc))
    if nc >= 2:
        dma_floor = min(b, max(1, -(-_MIN_DMA_BYTES // max(1, plane_in_bytes))))
        steps_cap = max(1, nc // _TARGET_GRID_STEPS)
        b = max(dma_floor, min(b, steps_cap))
    return max(1, min(b, nc))


def _align_sublane(b: int, nc: int, sub: int) -> int:
    """Second-to-last block dim must be a sublane multiple or the full dim."""
    if b >= nc:
        return nc
    if b >= sub:
        return (b // sub) * sub
    return min(nc, sub)


def _plane_batch_fused(nc, k2, nn, itemsize, w_itemsize, budget):
    per_plane = (2 * _pad_up(k2, 128) * itemsize      # input row, double buffered
                 + 2 * _pad_up(nn, 128) * itemsize    # output row, double buffered
                 + _pad_up(nn, 128) * 4)              # f32 accumulator row
    fixed = 2 * _tile_bytes(k2, nn, w_itemsize)       # resident kron weight
    b = (budget - fixed) // max(1, per_plane)
    return _clamp_batch(int(max(1, b)), nc, k2 * itemsize)


def _plane_batch_separable(nc, h_in, w_in, h, w, itemsize, w_itemsize, budget):
    per_plane = (
        2 * _tile_bytes(h_in, w_in, itemsize)   # input tile, double buffered
        + 2 * _tile_bytes(h, w, itemsize)       # output tile, double buffered
        + _tile_bytes(h_in, w, 4)               # width-interp intermediate (f32)
        + _tile_bytes(h, h_in, 4)               # broadcast height weights
        + _tile_bytes(h, w, 4))                 # f32 result before cast/store
    fixed = 2 * (_tile_bytes(h, h_in, w_itemsize)
                 + _tile_bytes(w_in, w, w_itemsize))
    b = (budget - fixed) // max(1, per_plane)
    return _clamp_batch(int(max(1, b)), nc, h_in * w_in * itemsize)


# ----------------------------------------------------------------------------
# Kernels
# ----------------------------------------------------------------------------
def _up_fused_kernel(x_ref, kt_ref, o_ref):
    # x_ref: (B, H_in*W_in)   kt_ref: (H_in*W_in, h*w)   o_ref: (B, h*w)
    # Single lane-dense MXU matmul; f32 accumulation regardless of dtype.
    o_ref[...] = jnp.dot(
        x_ref[...], kt_ref[...],
        preferred_element_type=jnp.float32).astype(o_ref.dtype)


def _up_separable_kernel(x_ref, wh_ref, wwt_ref, o_ref):
    # x_ref:   (B, H_in, W_in) batch of image planes
    # wh_ref:  (h, H_in)       height interpolation matrix
    # wwt_ref: (W_in, w)       width interpolation matrix (transposed)
    # o_ref:   (B, h, w)
    B, H_in, W_in = x_ref.shape
    h = wh_ref.shape[0]
    w = wwt_ref.shape[1]
    x = x_ref[...]

    # Width interpolation: one large MXU matmul with M = B*H_in.
    if H_in % 8 == 0:
        # Merging leading dims is layout-free when H_in is a sublane multiple.
        xw = jnp.dot(x.reshape(B * H_in, W_in), wwt_ref[...],
                     preferred_element_type=jnp.float32)
        xw = xw.reshape(B, H_in, w)
    else:
        # Reshape would force a sublane relayout copy every step; use the
        # batched-matmul form instead.
        wwt_b = jnp.broadcast_to(wwt_ref[...], (B, W_in, w))
        xw = jnp.einsum('bHW,bWo->bHo', x, wwt_b,
                        preferred_element_type=jnp.float32)

    if x.dtype == jnp.bfloat16:
        # Keep the second matmul on the native bf16 MXU path (f32 accumulate).
        xw = xw.astype(jnp.bfloat16)

    # Height interpolation: batched matmul over the plane batch.  The small
    # 2-D weight broadcast is charged to the VMEM budget (see module comment).
    wh_b = jnp.broadcast_to(wh_ref[...], (B, h, H_in))
    out = jnp.einsum('bhH,bHw->bhw', wh_b, xw,
                     preferred_element_type=jnp.float32)
    o_ref[...] = out.astype(o_ref.dtype)


# ----------------------------------------------------------------------------
# Wrappers
# ----------------------------------------------------------------------------
def _up_fused(x2d, H_in, W_in, h, w, w_dtype, budget, vmem_limit, plane_batch):
    nc, k2 = x2d.shape
    nn = h * w
    itemsize = x2d.dtype.itemsize
    w_itemsize = jnp.dtype(w_dtype).itemsize

    kron = np.kron(_interp_matrix(h, H_in), _interp_matrix(w, W_in))  # (nn,k2)
    kt = jnp.asarray(kron.T, dtype=w_dtype)                           # (k2,nn)

    if plane_batch is None:
        B = _plane_batch_fused(nc, k2, nn, itemsize, w_itemsize, budget)
    else:
        B = int(plane_batch)
    B = _align_sublane(max(1, min(B, nc)), nc, _sublane(itemsize))
    grid = (pl.cdiv(nc, B),)

    cost = pl.CostEstimate(
        flops=2 * nc * k2 * nn, transcendentals=0,
        bytes_accessed=nc * (k2 + nn) * itemsize + k2 * nn * w_itemsize)

    return pl.pallas_call(
        _up_fused_kernel,
        out_shape=jax.ShapeDtypeStruct((nc, nn), x2d.dtype),
        grid_spec=pltpu.PrefetchScalarGridSpec(
            num_scalar_prefetch=0,
            grid=grid,
            in_specs=[
                pl.BlockSpec((B, k2), lambda i: (i, 0)),
                pl.BlockSpec((k2, nn), lambda i: (0, 0)),
            ],
            out_specs=pl.BlockSpec((B, nn), lambda i: (i, 0)),
        ),
        compiler_params=pltpu.CompilerParams(
            dimension_semantics=("parallel",),
            vmem_limit_bytes=vmem_limit),
        cost_estimate=cost,
    )(x2d, kt)


def _up_separable(x3, h, w, w_dtype, budget, vmem_limit, plane_batch):
    nc, H_in, W_in = x3.shape
    itemsize = x3.dtype.itemsize
    w_itemsize = jnp.dtype(w_dtype).itemsize

    wh = jnp.asarray(_interp_matrix(h, H_in), dtype=w_dtype)       # (h, H_in)
    wwt = jnp.asarray(_interp_matrix(w, W_in).T, dtype=w_dtype)    # (W_in, w)

    if plane_batch is None:
        B = _plane_batch_separable(nc, H_in, W_in, h, w,
                                   itemsize, w_itemsize, budget)
    else:
        B = int(plane_batch)
    B = max(1, min(B, nc))
    grid = (pl.cdiv(nc, B),)

    # TODO(synk): very large (h, w) outputs would need a second grid axis
    # tiling the output spatially; not needed for HistoSeg decoder sizes.
    flops = 2 * nc * H_in * W_in * w + 2 * nc * h * H_in * w
    bytes_accessed = ((nc * H_in * W_in + nc * h * w) * itemsize
                      + (h * H_in + W_in * w) * w_itemsize)
    cost = pl.CostEstimate(flops=flops, transcendentals=0,
                           bytes_accessed=bytes_accessed)

    return pl.pallas_call(
        _up_separable_kernel,
        out_shape=jax.ShapeDtypeStruct((nc, h, w), x3.dtype),
        grid_spec=pltpu.PrefetchScalarGridSpec(
            num_scalar_prefetch=0,
            grid=grid,
            in_specs=[
                pl.BlockSpec((B, H_in, W_in), lambda i: (i, 0, 0)),
                pl.BlockSpec((h, H_in), lambda i: (0, 0)),
                pl.BlockSpec((W_in, w), lambda i: (0, 0)),
            ],
            out_specs=pl.BlockSpec((B, h, w), lambda i: (i, 0, 0)),
        ),
        compiler_params=pltpu.CompilerParams(
            dimension_semantics=("parallel",),
            vmem_limit_bytes=vmem_limit),
        cost_estimate=cost,
    )(x3, wh, wwt)


def _upsample_xla(x, h, w):
    """Plain-XLA path for sub-tile workloads (opt-in only)."""
    wh = jnp.asarray(_interp_matrix(h, x.shape[2]), jnp.float32)
    ww = jnp.asarray(_interp_matrix(w, x.shape[3]), jnp.float32)
    y = jnp.einsum('hH,ncHW,wW->nchw', wh, x.astype(jnp.float32), ww)
    return y.astype(x.dtype)


def up_bilinear(x: jnp.ndarray, h: int, w: int, *,
                plane_batch=None, allow_xla_fallback=False) -> jnp.ndarray:
    """Equivalent of Up().forward(x, h, w) for NCHW input."""
    N, C, H_in, W_in = x.shape
    h, w = int(h), int(w)
    nc = N * C
    itemsize = x.dtype.itemsize
    w_dtype = jnp.bfloat16 if x.dtype == jnp.bfloat16 else jnp.float32
    w_itemsize = jnp.dtype(w_dtype).itemsize

    if (allow_xla_fallback
            and nc * (H_in * W_in + h * w) * itemsize <= 128 * 1024):
        # Sub-tile workload: fixed pallas_call overhead dominates.
        return _upsample_xla(x, h, w)

    # Generation-aware VMEM budgeting (v5e/v6e: 128 MiB, v7x: 64 MiB per TC).
    cap = _vmem_capacity_bytes()
    budget = max(cap // 3, 16 * 1024 * 1024)
    vmem_limit = int(max(32 * 1024 * 1024, min(cap * 3 // 4, budget * 2)))

    kron_bytes = H_in * W_in * h * w * w_itemsize
    if kron_bytes <= _FUSED_WEIGHT_LIMIT_BYTES:
        out_flat = _up_fused(x.reshape(nc, H_in * W_in), H_in, W_in, h, w,
                             w_dtype, budget, vmem_limit, plane_batch)
    else:
        out_flat = _up_separable(x.reshape(nc, H_in, W_in), h, w,
                                 w_dtype, budget, vmem_limit, plane_batch)
    return out_flat.reshape(N, C, h, w)


# ----------------------------------------------------------------------------
# Pure-JAX reference (gather formulation of bilinear, align_corners=True)
# ----------------------------------------------------------------------------
def _reference(x, h, w):
    N, C, H_in, W_in = x.shape

    def src_coords(out_size, in_size):
        if out_size == 1:
            return jnp.zeros((1,), jnp.float32)
        scale = (in_size - 1) / (out_size - 1)
        return jnp.arange(out_size, dtype=jnp.float32) * jnp.float32(scale)

    sy = src_coords(h, H_in)
    sx = src_coords(w, W_in)
    y0 = jnp.clip(jnp.floor(sy).astype(jnp.int32), 0, H_in - 1)
    y1 = jnp.clip(y0 + 1, 0, H_in - 1)
    x0 = jnp.clip(jnp.floor(sx).astype(jnp.int32), 0, W_in - 1)
    x1 = jnp.clip(x0 + 1, 0, W_in - 1)
    fy = (sy - y0)[None, None, :, None]
    fx = (sx - x0)[None, None, None, :]
    g = lambda yi, xi: x[:, :, yi, :][:, :, :, xi]
    top = g(y0, x0) * (1 - fx) + g(y0, x1) * fx
    bot = g(y1, x0) * (1 - fx) + g(y1, x1) * fx
    return top * (1 - fy) + bot * fy


if __name__ == "__main__":
    key = jax.random.PRNGKey(0)
    k1, k2, k3, k4, k5 = jax.random.split(key, 5)

    # 1) Small shapes typical of the module (fused lane-dense path).
    x = jax.random.normal(k1, (2, 4, 16, 16), dtype=jnp.float32)
    out = jax.block_until_ready(up_bilinear(x, 32, 24))
    assert out.shape == (2, 4, 32, 24)
    assert jnp.allclose(out, _reference(x, 32, 24), atol=1e-5, rtol=1e-5)

    # 2) Output lane width not a multiple of 128, odd plane count.
    x2 = jax.random.normal(k2, (1, 3, 16, 16), dtype=jnp.float32)
    out2 = jax.block_until_ready(up_bilinear(x2, 20, 40))
    assert out2.shape == (1, 3, 20, 40)
    assert jnp.allclose(out2, _reference(x2, 20, 40), atol=1e-5, rtol=1e-5)

    # 3) Separable (two-matmul) path, forced small plane batch so the grid has
    #    several steps and a partial trailing block.
    x3 = jax.random.normal(k3, (1, 8, 32, 32), dtype=jnp.float32)
    out3 = jax.block_until_ready(up_bilinear(x3, 96, 96, plane_batch=3))
    assert out3.shape == (1, 8, 96, 96)
    assert jnp.allclose(out3, _reference(x3, 96, 96), atol=1e-4, rtol=1e-4)

    # 4) Fused path with a multi-step grid and a partial trailing block.
    x4 = jax.random.normal(k4, (3, 4, 16, 16), dtype=jnp.float32)
    out4 = jax.block_until_ready(up_bilinear(x4, 24, 40, plane_batch=8))
    assert out4.shape == (3, 4, 24, 40)
    assert jnp.allclose(out4, _reference(x4, 24, 40), atol=1e-5, rtol=1e-5)

    # 5) bfloat16 input: bf16 weights / bf16 MXU path with f32 accumulation.
    x5 = jax.random.normal(k5, (2, 4, 16, 16), dtype=jnp.bfloat16)
    out5 = jax.block_until_ready(up_bilinear(x5, 32, 32))
    ref5 = _reference(x5.astype(jnp.float32), 32, 32)
    assert out5.shape == (2, 4, 32, 32)
    assert jnp.allclose(out5.astype(jnp.float32), ref5, atol=3e-2, rtol=3e-2)

    print("KERNEL_OK")
</pallas_src>

<mosaic_0001>
module attributes {stable_mosaic.version = 11 : i64} {
  func.func @_up_fused_kernel(%arg0: i32, %arg1: memref<8x256xf32, #tpu.memory_space<vmem>>, %arg2: memref<256x768xf32, #tpu.memory_space<vmem>>, %arg3: memref<8x768xf32, #tpu.memory_space<vmem>>) attributes {dimension_semantics = [#tpu.dimension_semantics<parallel>], iteration_bounds = array<i64: 1>, scalar_prefetch = 0 : i64, scratch_operands = 0 : i64, tpu.core_type = #tpu.core_type<tc>, window_params = [{transform_indices = @transform_0, window_bounds = array<i64: 8, 256>}, {pipeline_mode = #tpu.pipeline_mode<synchronous>, transform_indices = @transform_1, window_bounds = array<i64: 256, 768>}, {transform_indices = @transform_2, window_bounds = array<i64: 8, 768>}]} {
    %c0 = arith.constant 0 : index
    %c0_0 = arith.constant 0 : index
    %0 = vector.load %arg1[%c0, %c0_0] : memref<8x256xf32, #tpu.memory_space<vmem>>, vector<8x256xf32>
    %c0_1 = arith.constant 0 : index
    %c0_2 = arith.constant 0 : index
    %1 = vector.load %arg2[%c0_1, %c0_2] : memref<256x768xf32, #tpu.memory_space<vmem>>, vector<256x768xf32>
    %cst = arith.constant dense<0.000000e+00> : vector<8x768xf32>
    %2 = tpu.matmul %0, %1, %cst {dimension_numbers = #tpu.dot_dimension_numbers<[1], [0], [0], [1], [0, 0, 1, 1], [], []>} : vector<8x256xf32>, vector<256x768xf32>, vector<8x768xf32> -> vector<8x768xf32>
    %c0_3 = arith.constant 0 : index
    %c0_4 = arith.constant 0 : index
    %3 = vector.load %arg3[%c0_3, %c0_4] : memref<8x768xf32, #tpu.memory_space<vmem>>, vector<8x768xf32>
    tpu.vector_store %arg3[%c0_3, %c0_4], %2 {strides = array<i32>} : memref<8x768xf32, #tpu.memory_space<vmem>>, vector<8x768xf32>,
    return
  }
  func.func @transform_0(%arg0: i32) -> (i32, i32) {
    %c0_i32 = arith.constant 0 : i32
    %c0_i32_0 = arith.constant 0 : i32
    return %arg0, %c0_i32 : i32, i32
  }
  func.func @transform_1(%arg0: i32) -> (i32, i32) {
    %c0_i32 = arith.constant 0 : i32
    %c0_i32_0 = arith.constant 0 : i32
    %c0_i32_1 = arith.constant 0 : i32
    return %c0_i32, %c0_i32_0 : i32, i32
  }
  func.func @transform_2(%arg0: i32) -> (i32, i32) {
    %c0_i32 = arith.constant 0 : i32
    %c0_i32_0 = arith.constant 0 : i32
    return %arg0, %c0_i32 : i32, i32
  }
}

</mosaic_0001>

<llo_original>
// kernel: tpu_custom_call.1
$region0: #{tpu_custom_call.1}
  #allocation0 [shape = 'u32[]', space=smem, size = 0x4, offset = 0x4, fixed_abs, tag = 'smem constant byte address 0x4 - core index']
  #allocation1 [shape = 'u32[144,128]{1,0:T(1,128)}', space=vmem, size = 0x12000, scoped, tag = 'internal scratch']
  %s0 = inlined_call_operand.hbm [shape: f32[8,256], index: 0, kind: input, shape index: {}]
  %s1 = inlined_call_operand.hbm [shape: f32[256,768], index: 1, kind: input, shape index: {}]
  %s2 = inlined_call_operand.hbm [shape: f32[8,768], index: 2, kind: output, shape index: {}]
  %s3 = sld [smem:[#allocation0]]
  $region26: #{tpu_custom_call.1} parent=0
    _
  %s5 = ssub.s32 1, %s3
  %s6 = scalar_select 0, %s5, %s3
  $region1: #{tpu_custom_call.1} parent=0
    #allocation2 [shape = 'u8[8192]{0}', space=vmem, size = 0x2000, scoped, tag = 'input window, operand 0, single buffered']
    #allocation3 [shape = 's32[1]{0}', space=sflag, size = 0x4, scoped, tag = 'scoped memory for tpu_custom_call.1']
    #allocation4 [shape = 's32[1]{0}', space=sflag, size = 0x4, scoped, tag = 'scoped memory for tpu_custom_call.1']
    #allocation5 [shape = 'u8[786432]{0}', space=vmem, size = 0xc0000, scoped, tag = 'input window, operand 1, single buffered']
    #allocation6 [shape = 's32[1]{0}', space=sflag, size = 0x4, scoped, tag = 'scoped memory for tpu_custom_call.1']
    #allocation7 [shape = 'u8[24576]{0}', space=vmem, size = 0x6000, scoped, tag = 'output window, operand 0, single buffered']
    %7 = vsyncpa [#allocation3], 0
    %8 = vsyncpa [#allocation6], 0
    %9 = vsyncpa [#allocation4], 0
    // Predicated region
    $region2: #{tpu_custom_call.1} parent=1 // pred_check
      _
    $region3: #{tpu_custom_call.1} parent=1 // pred_check_branch
      %11 = sbr.rel (0) target = $region5
    $region4: #{tpu_custom_call.1} parent=1 // pred_region
      %s13 = ssub.s32 256, 256
      %14 = vsyncadd [#allocation3], %s13
      %s16 = sshll.u32 [#allocation2], 4
      %s17 = int_to_ptr.vmem [resolvable:$true] %s16
      %19 = dma.hbm_to_vmem [thread:$0]  %s0, 256, %s17, [#allocation3]
    $region5: #{tpu_custom_call.1} parent=1 // pred_fallthru
      _
    // Predicated region
    $region6: #{tpu_custom_call.1} parent=1 // pred_check
      _
    $region7: #{tpu_custom_call.1} parent=1 // pred_check_branch
      %21 = sbr.rel (0) target = $region9
    $region8: #{tpu_custom_call.1} parent=1 // pred_region
      %s23 = ssub.s32 24576, 24576
      %24 = vsyncadd [#allocation6], %s23
      %s25 = sshll.u32 [#allocation5], 4
      %s26 = int_to_ptr.vmem [resolvable:$true] %s25
      %31 = dma.hbm_to_vmem [thread:$0]  %s1, 24576, %s26, [#allocation6], 768, 768, 48
    $region9: #{tpu_custom_call.1} parent=1 // pred_fallthru
      _
    // Predicated region
    $region10: #{tpu_custom_call.1} parent=1 // pred_check
      _
    $region11: #{tpu_custom_call.1} parent=1 // pred_check_branch
      %33 = sbr.rel (0) target = $region13
    $region12: #{tpu_custom_call.1} parent=1 // pred_region
      %34 = dma.done [#allocation3], 256
    $region13: #{tpu_custom_call.1} parent=1 // pred_fallthru
      _
    // Predicated region
    $region14: #{tpu_custom_call.1} parent=1 // pred_check
      _
    $region15: #{tpu_custom_call.1} parent=1 // pred_check_branch
      %36 = sbr.rel (0) target = $region17
    $region16: #{tpu_custom_call.1} parent=1 // pred_region
      %37 = dma.done [#allocation6], 24576
    $region17: #{tpu_custom_call.1} parent=1 // pred_fallthru
      _
    %v38 = vld [vmem:[#allocation2] sm:$0xff]
    %v39 = vld [vmem:[#allocation2 + $0x8] sm:$0xff]
    %v40 = vld [vmem:[#allocation5] sm:$0xff]
    %v41 = vld [vmem:[#allocation5 + $0x8] sm:$0xff]
    %v42 = vld [vmem:[#allocation5 + $0x10] sm:$0xff]
    %v43 = vld [vmem:[#allocation5 + $0x18] sm:$0xff]
    %v44 = vld [vmem:[#allocation5 + $0x20] sm:$0xff]
    %v45 = vld [vmem:[#allocation5 + $0x28] sm:$0xff]
    %v46 = vld [vmem:[#allocation5 + $0x30] sm:$0xff]
    %v47 = vld [vmem:[#allocation5 + $0x38] sm:$0xff]
    %v48 = vld [vmem:[#allocation5 + $0x40] sm:$0xff]
    %v49 = vld [vmem:[#allocation5 + $0x48] sm:$0xff]
    %v50 = vld [vmem:[#allocation5 + $0x50] sm:$0xff]
    %v51 = vld [vmem:[#allocation5 + $0x58] sm:$0xff]
    %v52 = vld [vmem:[#allocation5 + $0x60] sm:$0xff]
    %v53 = vld [vmem:[#allocation5 + $0x68] sm:$0xff]
    %v54 = vld [vmem:[#allocation5 + $0x70] sm:$0xff]
    %v55 = vld [vmem:[#allocation5 + $0x78] sm:$0xff]
    %v56 = vld [vmem:[#allocation5 + $0x80] sm:$0xff]
    %v57 = vld [vmem:[#allocation5 + $0x88] sm:$0xff]
    %v58 = vld [vmem:[#allocation5 + $0x90] sm:$0xff]
    %v59 = vld [vmem:[#allocation5 + $0x98] sm:$0xff]
    %v60 = vld [vmem:[#allocation5 + $0xa0] sm:$0xff]
    %v61 = vld [vmem:[#allocation5 + $0xa8] sm:$0xff]
    %v62 = vld [vmem:[#allocation5 + $0xb0] sm:$0xff]
    %v63 = vld [vmem:[#allocation5 + $0xb8] sm:$0xff]
    %v64 = vld [vmem:[#allocation5 + $0xc0] sm:$0xff]
    %v65 = vld [vmem:[#allocation5 + $0xc8] sm:$0xff]
    %v66 = vld [vmem:[#allocation5 + $0xd0] sm:$0xff]
    %v67 = vld [vmem:[#allocation5 + $0xd8] sm:$0xff]
    %v68 = vld [vmem:[#allocation5 + $0xe0] sm:$0xff]
    %v69 = vld [vmem:[#allocation5 + $0xe8] sm:$0xff]
    %v70 = vld [vmem:[#allocation5 + $0xf0] sm:$0xff]
    %v71 = vld [vmem:[#allocation5 + $0xf8] sm:$0xff]
    %v72 = vld [vmem:[#allocation5 + $0x100] sm:$0xff]
    %v73 = vld [vmem:[#allocation5 + $0x108] sm:$0xff]
    %v74 = vld [vmem:[#allocation5 + $0x110] sm:$0xff]
    %v75 = vld [vmem:[#allocation5 + $0x118] sm:$0xff]
    %v76 = vld [vmem:[#allocation5 + $0x120] sm:$0xff]
    %v77 = vld [vmem:[#allocation5 + $0x128] sm:$0xff]
    %v78 = vld [vmem:[#allocation5 + $0x130] sm:$0xff]
    %v79 = vld [vmem:[#allocation5 + $0x138] sm:$0xff]
    %v80 = vld [vmem:[#allocation5 + $0x140] sm:$0xff]
    %v81 = vld [vmem:[#allocation5 + $0x148] sm:$0xff]
    %v82 = vld [vmem:[#allocation5 + $0x150] sm:$0xff]
    %v83 = vld [vmem:[#allocation5 + $0x158] sm:$0xff]
    %v84 = vld [vmem:[#allocation5 + $0x160] sm:$0xff]
    %v85 = vld [vmem:[#allocation5 + $0x168] sm:$0xff]
    %v86 = vld [vmem:[#allocation5 + $0x170] sm:$0xff]
    %v87 = vld [vmem:[#allocation5 + $0x178] sm:$0xff]
    %v88 = vld [vmem:[#allocation5 + $0x180] sm:$0xff]
    %v89 = vld [vmem:[#allocation5 + $0x188] sm:$0xff]
    %v90 = vld [vmem:[#allocation5 + $0x190] sm:$0xff]
    %v91 = vld [vmem:[#allocation5 + $0x198] sm:$0xff]
    %v92 = vld [vmem:[#allocation5 + $0x1a0] sm:$0xff]
    %v93 = vld [vmem:[#allocation5 + $0x1a8] sm:$0xff]
    %v94 = vld [vmem:[#allocation5 + $0x1b0] sm:$0xff]
    %v95 = vld [vmem:[#allocation5 + $0x1b8] sm:$0xff]
    %v96 = vld [vmem:[#allocation5 + $0x1c0] sm:$0xff]
    %v97 = vld [vmem:[#allocation5 + $0x1c8] sm:$0xff]
    %v98 = vld [vmem:[#allocation5 + $0x1d0] sm:$0xff]
    %v99 = vld [vmem:[#allocation5 + $0x1d8] sm:$0xff]
    %v100 = vld [vmem:[#allocation5 + $0x1e0] sm:$0xff]
    %v101 = vld [vmem:[#allocation5 + $0x1e8] sm:$0xff]
    %v102 = vld [vmem:[#allocation5 + $0x1f0] sm:$0xff]
    %v103 = vld [vmem:[#allocation5 + $0x1f8] sm:$0xff]
    %v104 = vld [vmem:[#allocation5 + $0x200] sm:$0xff]
    %v105 = vld [vmem:[#allocation5 + $0x208] sm:$0xff]
    %v106 = vld [vmem:[#allocation5 + $0x210] sm:$0xff]
    %v107 = vld [vmem:[#allocation5 + $0x218] sm:$0xff]
    %v108 = vld [vmem:[#allocation5 + $0x220] sm:$0xff]
    %v109 = vld [vmem:[#allocation5 + $0x228] sm:$0xff]
    %v110 = vld [vmem:[#allocation5 + $0x230] sm:$0xff]
    %v111 = vld [vmem:[#allocation5 + $0x238] sm:$0xff]
    %v112 = vld [vmem:[#allocation5 + $0x240] sm:$0xff]
    %v113 = vld [vmem:[#allocation5 + $0x248] sm:$0xff]
    %v114 = vld [vmem:[#allocation5 + $0x250] sm:$0xff]
    %v115 = vld [vmem:[#allocation5 + $0x258] sm:$0xff]
    %v116 = vld [vmem:[#allocation5 + $0x260] sm:$0xff]
    %v117 = vld [vmem:[#allocation5 + $0x268] sm:$0xff]
    %v118 = vld [vmem:[#allocation5 + $0x270] sm:$0xff]
    %v119 = vld [vmem:[#allocation5 + $0x278] sm:$0xff]
    %v120 = vld [vmem:[#allocation5 + $0x280] sm:$0xff]
    %v121 = vld [vmem:[#allocation5 + $0x288] sm:$0xff]
    %v122 = vld [vmem:[#allocation5 + $0x290] sm:$0xff]
    %v123 = vld [vmem:[#allocation5 + $0x298] sm:$0xff]
    %v124 = vld [vmem:[#allocation5 + $0x2a0] sm:$0xff]
    %v125 = vld [vmem:[#allocation5 + $0x2a8] sm:$0xff]
    %v126 = vld [vmem:[#allocation5 + $0x2b0] sm:$0xff]
    %v127 = vld [vmem:[#allocation5 + $0x2b8] sm:$0xff]
    %v128 = vld [vmem:[#allocation5 + $0x2c0] sm:$0xff]
    %v129 = vld [vmem:[#allocation5 + $0x2c8] sm:$0xff]
    %v130 = vld [vmem:[#allocation5 + $0x2d0] sm:$0xff]
    %v131 = vld [vmem:[#allocation5 + $0x2d8] sm:$0xff]
    %v132 = vld [vmem:[#allocation5 + $0x2e0] sm:$0xff]
    %v133 = vld [vmem:[#allocation5 + $0x2e8] sm:$0xff]
    %v134 = vld [vmem:[#allocation5 + $0x2f0] sm:$0xff]
    %v135 = vld [vmem:[#allocation5 + $0x2f8] sm:$0xff]
    %v136 = vld [vmem:[#allocation5 + $0x300] sm:$0xff]
    %v137 = vld [vmem:[#allocation5 + $0x308] sm:$0xff]
    %v138 = vld [vmem:[#allocation5 + $0x310] sm:$0xff]
    %v139 = vld [vmem:[#allocation5 + $0x318] sm:$0xff]
    %v140 = vld [vmem:[#allocation5 + $0x320] sm:$0xff]
    %v141 = vld [vmem:[#allocation5 + $0x328] sm:$0xff]
    %v142 = vld [vmem:[#allocation5 + $0x330] sm:$0xff]
    %v143 = vld [vmem:[#allocation5 + $0x338] sm:$0xff]
    %v144 = vld [vmem:[#allocation5 + $0x340] sm:$0xff]
    %v145 = vld [vmem:[#allocation5 + $0x348] sm:$0xff]
    %v146 = vld [vmem:[#allocation5 + $0x350] sm:$0xff]
    %v147 = vld [vmem:[#allocation5 + $0x358] sm:$0xff]
    %v148 = vld [vmem:[#allocation5 + $0x360] sm:$0xff]
    %v149 = vld [vmem:[#allocation5 + $0x368] sm:$0xff]
    %v150 = vld [vmem:[#allocation5 + $0x370] sm:$0xff]
    %v151 = vld [vmem:[#allocation5 + $0x378] sm:$0xff]
    %v152 = vld [vmem:[#allocation5 + $0x380] sm:$0xff]
    %v153 = vld [vmem:[#allocation5 + $0x388] sm:$0xff]
    %v154 = vld [vmem:[#allocation5 + $0x390] sm:$0xff]
    %v155 = vld [vmem:[#allocation5 + $0x398] sm:$0xff]
    %v156 = vld [vmem:[#allocation5 + $0x3a0] sm:$0xff]
    %v157 = vld [vmem:[#allocation5 + $0x3a8] sm:$0xff]
    %v158 = vld [vmem:[#allocation5 + $0x3b0] sm:$0xff]
    %v159 = vld [vmem:[#allocation5 + $0x3b8] sm:$0xff]
    %v160 = vld [vmem:[#allocation5 + $0x3c0] sm:$0xff]
    %v161 = vld [vmem:[#allocation5 + $0x3c8] sm:$0xff]
    %v162 = vld [vmem:[#allocation5 + $0x3d0] sm:$0xff]
    %v163 = vld [vmem:[#allocation5 + $0x3d8] sm:$0xff]
    %v164 = vld [vmem:[#allocation5 + $0x3e0] sm:$0xff]
    %v165 = vld [vmem:[#allocation5 + $0x3e8] sm:$0xff]
    %v166 = vld [vmem:[#allocation5 + $0x3f0] sm:$0xff]
    %v167 = vld [vmem:[#allocation5 + $0x3f8] sm:$0xff]
    %v168 = vld [vmem:[#allocation5 + $0x400] sm:$0xff]
    %v169 = vld [vmem:[#allocation5 + $0x408] sm:$0xff]
    %v170 = vld [vmem:[#allocation5 + $0x410] sm:$0xff]
    %v171 = vld [vmem:[#allocation5 + $0x418] sm:$0xff]
    %v172 = vld [vmem:[#allocation5 + $0x420] sm:$0xff]
    %v173 = vld [vmem:[#allocation5 + $0x428] sm:$0xff]
    %v174 = vld [vmem:[#allocation5 + $0x430] sm:$0xff]
    %v175 = vld [vmem:[#allocation5 + $0x438] sm:$0xff]
    %v176 = vld [vmem:[#allocation5 + $0x440] sm:$0xff]
    %v177 = vld [vmem:[#allocation5 + $0x448] sm:$0xff]
    %v178 = vld [vmem:[#allocation5 + $0x450] sm:$0xff]
    %v179 = vld [vmem:[#allocation5 + $0x458] sm:$0xff]
    %v180 = vld [vmem:[#allocation5 + $0x460] sm:$0xff]
    %v181 = vld [vmem:[#allocation5 + $0x468] sm:$0xff]
    %v182 = vld [vmem:[#allocation5 + $0x470] sm:$0xff]
    %v183 = vld [vmem:[#allocation5 + $0x478] sm:$0xff]
    %v184 = vld [vmem:[#allocation5 + $0x480] sm:$0xff]
    %v185 = vld [vmem:[#allocation5 + $0x488] sm:$0xff]
    %v186 = vld [vmem:[#allocation5 + $0x490] sm:$0xff]
    %v187 = vld [vmem:[#allocation5 + $0x498] sm:$0xff]
    %v188 = vld [vmem:[#allocation5 + $0x4a0] sm:$0xff]
    %v189 = vld [vmem:[#allocation5 + $0x4a8] sm:$0xff]
    %v190 = vld [vmem:[#allocation5 + $0x4b0] sm:$0xff]
    %v191 = vld [vmem:[#allocation5 + $0x4b8] sm:$0xff]
    %v192 = vld [vmem:[#allocation5 + $0x4c0] sm:$0xff]
    %v193 = vld [vmem:[#allocation5 + $0x4c8] sm:$0xff]
    %v194 = vld [vmem:[#allocation5 + $0x4d0] sm:$0xff]
    %v195 = vld [vmem:[#allocation5 + $0x4d8] sm:$0xff]
    %v196 = vld [vmem:[#allocation5 + $0x4e0] sm:$0xff]
    %v197 = vld [vmem:[#allocation5 + $0x4e8] sm:$0xff]
    %v198 = vld [vmem:[#allocation5 + $0x4f0] sm:$0xff]
    %v199 = vld [vmem:[#allocation5 + $0x4f8] sm:$0xff]
    %v200 = vld [vmem:[#allocation5 + $0x500] sm:$0xff]
    %v201 = vld [vmem:[#allocation5 + $0x508] sm:$0xff]
    %v202 = vld [vmem:[#allocation5 + $0x510] sm:$0xff]
    %v203 = vld [vmem:[#allocation5 + $0x518] sm:$0xff]
    %v204 = vld [vmem:[#allocation5 + $0x520] sm:$0xff]
    %v205 = vld [vmem:[#allocation5 + $0x528] sm:$0xff]
    %v206 = vld [vmem:[#allocation5 + $0x530] sm:$0xff]
    %v207 = vld [vmem:[#allocation5 + $0x538] sm:$0xff]
    %v208 = vld [vmem:[#allocation5 + $0x540] sm:$0xff]
    %v209 = vld [vmem:[#allocation5 + $0x548] sm:$0xff]
    %v210 = vld [vmem:[#allocation5 + $0x550] sm:$0xff]
    %v211 = vld [vmem:[#allocation5 + $0x558] sm:$0xff]
    %v212 = vld [vmem:[#allocation5 + $0x560] sm:$0xff]
    %v213 = vld [vmem:[#allocation5 + $0x568] sm:$0xff]
    %v214 = vld [vmem:[#allocation5 + $0x570] sm:$0xff]
    %v215 = vld [vmem:[#allocation5 + $0x578] sm:$0xff]
    %v216 = vld [vmem:[#allocation5 + $0x580] sm:$0xff]
    %v217 = vld [vmem:[#allocation5 + $0x588] sm:$0xff]
    %v218 = vld [vmem:[#allocation5 + $0x590] sm:$0xff]
    %v219 = vld [vmem:[#allocation5 + $0x598] sm:$0xff]
    %v220 = vld [vmem:[#allocation5 + $0x5a0] sm:$0xff]
    %v221 = vld [vmem:[#allocation5 + $0x5a8] sm:$0xff]
    %v222 = vld [vmem:[#allocation5 + $0x5b0] sm:$0xff]
    %v223 = vld [vmem:[#allocation5 + $0x5b8] sm:$0xff]
    %v224 = vld [vmem:[#allocation5 + $0x5c0] sm:$0xff]
    %v225 = vld [vmem:[#allocation5 + $0x5c8] sm:$0xff]
    %v226 = vld [vmem:[#allocation5 + $0x5d0] sm:$0xff]
    %v227 = vld [vmem:[#allocation5 + $0x5d8] sm:$0xff]
    %v228 = vld [vmem:[#allocation5 + $0x5e0] sm:$0xff]
    %v229 = vld [vmem:[#allocation5 + $0x5e8] sm:$0xff]
    %v230 = vld [vmem:[#allocation5 + $0x5f0] sm:$0xff]
    %v231 = vld [vmem:[#allocation5 + $0x5f8] sm:$0xff]
    %232 = vmatprep.subr.mxu0 %v131
    %233 = vmatpush1.msra.mxu0 %v130
    %234 = vmatprep.subr.mxu0 %v125
    %235 = vmatpush1.msra.mxu0 %v124
    %236 = vmatprep.subr.mxu0 %v119
    %237 = vmatpush1.msra.mxu0 %v118
    %238 = vmatprep.subr.mxu0 %v113
    %239 = vmatpush1.msra.mxu0 %v112
    %240 = vmatprep.subr.mxu0 %v107
    %241 = vmatpush1.msra.mxu0 %v106
    %242 = vmatprep.subr.mxu0 %v101
    %243 = vmatpush1.msra.mxu0 %v100
    %244 = vmatprep.subr.mxu0 %v95
    %245 = vmatpush1.msra.mxu0 %v94
    %246 = vmatprep.subr.mxu0 %v89
    %247 = vmatpush1.msra.mxu0 %v88
    %248 = vmatprep.subr.mxu0 %v83
    %249 = vmatpush1.msra.mxu0 %v82
    %250 = vmatprep.subr.mxu0 %v77
    %251 = vmatpush1.msra.mxu0 %v76
    %252 = vmatprep.subr.mxu0 %v71
    %253 = vmatpush1.msra.mxu0 %v70
    %254 = vmatprep.subr.mxu0 %v65
    %255 = vmatpush1.msra.mxu0 %v64
    %256 = vmatprep.subr.mxu0 %v59
    %257 = vmatpush1.msra.mxu0 %v58
    %258 = vmatprep.subr.mxu0 %v53
    %259 = vmatpush1.msra.mxu0 %v52
    %260 = vmatprep.subr.mxu0 %v47
    %261 = vmatpush1.msra.mxu0 %v46
    %262 = vmatprep.subr.mxu0 %v41
    %263 = vmatpush1.msra.mxu0 %v40
    %264 = vmatprep.subr.mxu0 %v227
    %265 = vmatpush2.msra.mxu0 %v226
    %266 = vmatprep.subr.mxu0 %v221
    %267 = vmatpush2.msra.mxu0 %v220
    %268 = vmatprep.subr.mxu0 %v215
    %269 = vmatpush2.msra.mxu0 %v214
    %270 = vmatprep.subr.mxu0 %v209
    %271 = vmatpush2.msra.mxu0 %v208
    %272 = vmatprep.subr.mxu0 %v203
    %273 = vmatpush2.msra.mxu0 %v202
    %274 = vmatprep.subr.mxu0 %v197
    %275 = vmatpush2.msra.mxu0 %v196
    %276 = vmatprep.subr.mxu0 %v191
    %277 = vmatpush2.msra.mxu0 %v190
    %278 = vmatprep.subr.mxu0 %v185
    %279 = vmatpush2.msra.mxu0 %v184
    %280 = vmatprep.subr.mxu0 %v179
    %281 = vmatpush2.msra.mxu0 %v178
    %282 = vmatprep.subr.mxu0 %v173
    %283 = vmatpush2.msra.mxu0 %v172
    %284 = vmatprep.subr.mxu0 %v167
    %285 = vmatpush2.msra.mxu0 %v166
    %286 = vmatprep.subr.mxu0 %v161
    %287 = vmatpush2.msra.mxu0 %v160
    %288 = vmatprep.subr.mxu0 %v155
    %289 = vmatpush2.msra.mxu0 %v154
    %290 = vmatprep.subr.mxu0 %v149
    %291 = vmatpush2.msra.mxu0 %v148
    %292 = vmatprep.subr.mxu0 %v143
    %293 = vmatpush2.msra.mxu0 %v142
    %294 = vmatprep.subr.mxu0 %v137
    %295 = vmatpush2.msra.mxu0 %v136
    %296 = vmatprep.mubr.f32.mxu0 %v39
    %297 = vmatmul.mubr.f32.gmra.mxu0 %v38
    %v298 = vpop.f32.mrf.mxu0
    %v299 = vadd.f32 0.0, %v298
    %v300 = vpop.f32.mrf.mxu0
    %v301 = vadd.f32 0.0, %v300
    %302 = vdwg.mxu0
    %303 = vmatprep.subr.mxu0 %v133
    %304 = vmatpush1.msra.mxu0 %v132
    %305 = vmatprep.subr.mxu0 %v127
    %306 = vmatpush1.msra.mxu0 %v126
    %307 = vmatprep.subr.mxu0 %v121
    %308 = vmatpush1.msra.mxu0 %v120
    %309 = vmatprep.subr.mxu0 %v115
    %310 = vmatpush1.msra.mxu0 %v114
    %311 = vmatprep.subr.mxu0 %v109
    %312 = vmatpush1.msra.mxu0 %v108
    %313 = vmatprep.subr.mxu0 %v103
    %314 = vmatpush1.msra.mxu0 %v102
    %315 = vmatprep.subr.mxu0 %v97
    %316 = vmatpush1.msra.mxu0 %v96
    %317 = vmatprep.subr.mxu0 %v91
    %318 = vmatpush1.msra.mxu0 %v90
    %319 = vmatprep.subr.mxu0 %v85
    %320 = vmatpush1.msra.mxu0 %v84
    %321 = vmatprep.subr.mxu0 %v79
    %322 = vmatpush1.msra.mxu0 %v78
    %323 = vmatprep.subr.mxu0 %v73
    %324 = vmatpush1.msra.mxu0 %v72
    %325 = vmatprep.subr.mxu0 %v67
    %326 = vmatpush1.msra.mxu0 %v66
    %327 = vmatprep.subr.mxu0 %v61
    %328 = vmatpush1.msra.mxu0 %v60
    %329 = vmatprep.subr.mxu0 %v55
    %330 = vmatpush1.msra.mxu0 %v54
    %331 = vmatprep.subr.mxu0 %v49
    %332 = vmatpush1.msra.mxu0 %v48
    %333 = vmatprep.subr.mxu0 %v43
    %334 = vmatpush1.msra.mxu0 %v42
    %335 = vmatprep.subr.mxu0 %v229
    %336 = vmatpush2.msra.mxu0 %v228
    %337 = vmatprep.subr.mxu0 %v223
    %338 = vmatpush2.msra.mxu0 %v222
    %339 = vmatprep.subr.mxu0 %v217
    %340 = vmatpush2.msra.mxu0 %v216
    %341 = vmatprep.subr.mxu0 %v211
    %342 = vmatpush2.msra.mxu0 %v210
    %343 = vmatprep.subr.mxu0 %v205
    %344 = vmatpush2.msra.mxu0 %v204
    %345 = vmatprep.subr.mxu0 %v199
    %346 = vmatpush2.msra.mxu0 %v198
    %347 = vmatprep.subr.mxu0 %v193
    %348 = vmatpush2.msra.mxu0 %v192
    %349 = vmatprep.subr.mxu0 %v187
    %350 = vmatpush2.msra.mxu0 %v186
    %351 = vmatprep.subr.mxu0 %v181
    %352 = vmatpush2.msra.mxu0 %v180
    %353 = vmatprep.subr.mxu0 %v175
    %354 = vmatpush2.msra.mxu0 %v174
    %355 = vmatprep.subr.mxu0 %v169
    %356 = vmatpush2.msra.mxu0 %v168
    %357 = vmatprep.subr.mxu0 %v163
    %358 = vmatpush2.msra.mxu0 %v162
    %359 = vmatprep.subr.mxu0 %v157
    %360 = vmatpush2.msra.mxu0 %v156
    %361 = vmatprep.subr.mxu0 %v151
    %362 = vmatpush2.msra.mxu0 %v150
    %363 = vmatprep.subr.mxu0 %v145
    %364 = vmatpush2.msra.mxu0 %v144
    %365 = vmatprep.subr.mxu0 %v139
    %366 = vmatpush2.msra.mxu0 %v138
    %367 = vmatprep.mubr.f32.mxu0 %v39
    %368 = vmatmul.mubr.f32.gmra.mxu0 %v38
    %v369 = vpop.f32.mrf.mxu0
    %v370 = vadd.f32 0.0, %v369
    %v371 = vpop.f32.mrf.mxu0
    %v372 = vadd.f32 0.0, %v371
    %373 = vdwg.mxu0
    %374 = vmatprep.subr.mxu0 %v135
    %375 = vmatpush1.msra.mxu0 %v134
    %376 = vmatprep.subr.mxu0 %v129
    %377 = vmatpush1.msra.mxu0 %v128
    %378 = vmatprep.subr.mxu0 %v123
    %379 = vmatpush1.msra.mxu0 %v122
    %380 = vmatprep.subr.mxu0 %v117
    %381 = vmatpush1.msra.mxu0 %v116
    %382 = vmatprep.subr.mxu0 %v111
    %383 = vmatpush1.msra.mxu0 %v110
    %384 = vmatprep.subr.mxu0 %v105
    %385 = vmatpush1.msra.mxu0 %v104
    %386 = vmatprep.subr.mxu0 %v99
    %387 = vmatpush1.msra.mxu0 %v98
    %388 = vmatprep.subr.mxu0 %v93
    %389 = vmatpush1.msra.mxu0 %v92
    %390 = vmatprep.subr.mxu0 %v87
    %391 = vmatpush1.msra.mxu0 %v86
    %392 = vmatprep.subr.mxu0 %v81
    %393 = vmatpush1.msra.mxu0 %v80
    %394 = vmatprep.subr.mxu0 %v75
    %395 = vmatpush1.msra.mxu0 %v74
    %396 = vmatprep.subr.mxu0 %v69
    %397 = vmatpush1.msra.mxu0 %v68
    %398 = vmatprep.subr.mxu0 %v63
    %399 = vmatpush1.msra.mxu0 %v62
    %400 = vmatprep.subr.mxu0 %v57
    %401 = vmatpush1.msra.mxu0 %v56
    %402 = vmatprep.subr.mxu0 %v51
    %403 = vmatpush1.msra.mxu0 %v50
    %404 = vmatprep.subr.mxu0 %v45
    %405 = vmatpush1.msra.mxu0 %v44
    %406 = vmatprep.subr.mxu0 %v231
    %407 = vmatpush2.msra.mxu0 %v230
    %408 = vmatprep.subr.mxu0 %v225
    %409 = vmatpush2.msra.mxu0 %v224
    %410 = vmatprep.subr.mxu0 %v219
    %411 = vmatpush2.msra.mxu0 %v218
    %412 = vmatprep.subr.mxu0 %v213
    %413 = vmatpush2.msra.mxu0 %v212
    %414 = vmatprep.subr.mxu0 %v207
    %415 = vmatpush2.msra.mxu0 %v206
    %416 = vmatprep.subr.mxu0 %v201
    %417 = vmatpush2.msra.mxu0 %v200
    %418 = vmatprep.subr.mxu0 %v195
    %419 = vmatpush2.msra.mxu0 %v194
    %420 = vmatprep.subr.mxu0 %v189
    %421 = vmatpush2.msra.mxu0 %v188
    %422 = vmatprep.subr.mxu0 %v183
    %423 = vmatpush2.msra.mxu0 %v182
    %424 = vmatprep.subr.mxu0 %v177
    %425 = vmatpush2.msra.mxu0 %v176
    %426 = vmatprep.subr.mxu0 %v171
    %427 = vmatpush2.msra.mxu0 %v170
    %428 = vmatprep.subr.mxu0 %v165
    %429 = vmatpush2.msra.mxu0 %v164
    %430 = vmatprep.subr.mxu0 %v159
    %431 = vmatpush2.msra.mxu0 %v158
    %432 = vmatprep.subr.mxu0 %v153
    %433 = vmatpush2.msra.mxu0 %v152
    %434 = vmatprep.subr.mxu0 %v147
    %435 = vmatpush2.msra.mxu0 %v146
    %436 = vmatprep.subr.mxu0 %v141
    %437 = vmatpush2.msra.mxu0 %v140
    %438 = vmatprep.mubr.f32.mxu0 %v39
    %439 = vmatmul.mubr.f32.gmra.mxu0 %v38
    %v440 = vpop.f32.mrf.mxu0
    %v441 = vadd.f32 0.0, %v440
    %v442 = vpop.f32.mrf.mxu0
    %v443 = vadd.f32 0.0, %v442
    %444 = vdwg.mxu0
    %445 = vst [vmem:[#allocation7] sm:$0xff] %v299
    %446 = vst [vmem:[#allocation7 + $0x8] sm:$0xff] %v301
    %447 = vst [vmem:[#allocation7 + $0x10] sm:$0xff] %v370
    %448 = vst [vmem:[#allocation7 + $0x18] sm:$0xff] %v372
    %449 = vst [vmem:[#allocation7 + $0x20] sm:$0xff] %v441
    %450 = vst [vmem:[#allocation7 + $0x28] sm:$0xff] %v443
    // Predicated region
    $region18: #{tpu_custom_call.1} parent=1 // pred_check
      _
    $region19: #{tpu_custom_call.1} parent=1 // pred_check_branch
      %452 = sbr.rel (0) target = $region21
    $region20: #{tpu_custom_call.1} parent=1 // pred_region
      %s454 = ssub.s32 768, 768
      %455 = vsyncadd [#allocation4], %s454
      %s457 = sshll.u32 [#allocation7], 4
      %s458 = int_to_ptr.vmem [resolvable:$true] %s457
      %460 = dma.vmem_to_hbm [thread:$0]  %s458, 768, %s2, [#allocation4]
    $region21: #{tpu_custom_call.1} parent=1 // pred_fallthru
      _
    // Predicated region
    $region22: #{tpu_custom_call.1} parent=1 // pred_check
      _
    $region23: #{tpu_custom_call.1} parent=1 // pred_check_branch
      %462 = sbr.rel (0) target = $region25
    $region24: #{tpu_custom_call.1} parent=1 // pred_region
      %463 = dma.done [#allocation4], 768
    $region25: #{tpu_custom_call.1} parent=1 // pred_fallthru
      _
    %464 = vsyncpa [#allocation3], 1
    %465 = vsyncpa [#allocation6], 1
    %466 = vsyncpa [#allocation4], 1

</llo_original>
